<compile_context>
chip_gen: v5e
topology: v5e:2x2
jax: 0.10.0
libtpu: 0.0.40
codegen_flags: <defaults>
</compile_context>

<pallas_src>
import jax
import jax.numpy as jnp
from jax.experimental import pallas as pl
from jax.experimental.pallas import tpu as pltpu


def coxph_kernel(xt_ref, w1t_ref, w2t_ref, pvec_ref, o_ref):
    H1 = w1t_ref.shape[0]
    H2 = w2t_ref.shape[0]

    # Packed small parameters (f32 column vectors, broadcast over the lane/batch axis):
    #   pvec[:, 0] = b1'   pvec[:, 1] = b2'   pvec[:, 2] = w3   pvec[0, 3] = b3
    b1 = pvec_ref[0:H1, 0:1]     # (H1, 1)
    b2 = pvec_ref[0:H2, 1:2]     # (H2, 1)
    w3 = pvec_ref[0:H2, 2:3]     # (H2, 1)
    b3 = pvec_ref[0:1, 3:4]      # (1, 1)

    # In-kernel cast (keeps a single HBM pass over x; wrapper does NOT pre-cast).
    x = xt_ref[...].astype(jnp.bfloat16)                                   # (F, tb)

    # Layer 1: Linear (BN folded) + ReLU.  bf16 MXU, f32 accumulate, lane-dense (H1, tb).
    h = jnp.dot(w1t_ref[...], x, preferred_element_type=jnp.float32) + b1
    h = jnp.maximum(h, 0.0)

    # Layer 2: Linear (BN folded) + ReLU.  bf16 MXU, f32 accumulate, lane-dense (H2, tb).
    h = jnp.dot(w2t_ref[...], h.astype(jnp.bfloat16),
                preferred_element_type=jnp.float32) + b2
    h = jnp.maximum(h, 0.0)

    # Output head Linear(H2, 1): VPU multiply + XLU sublane reduce over H2 rows
    # -> a dense (1, tb) row.  (Alternative: (1,H2)@(H2,tb) MXU matvec; pick whichever
    # leaves the vector-extended slot unsaturated in the bundle dump.)
    o_ref[...] = jnp.sum(h * w3, axis=0, keepdims=True) + b3


def coxph_forward(x, params, tb=None, x_is_transposed=False):
    """CoxPH risk scores.

    x: [B, F] float32 (or [F, B] if x_is_transposed=True, which skips the layout pass).
    params: dict with bf16 w1t [H1,F], w2t [H2,H1] and packed f32 pvec [128,8].
    Returns [B, 1] float32.
    """
    if x_is_transposed:
        F, B = x.shape
        xt = x
    else:
        B, F = x.shape
        xt = x.T  # single layout pass; provide feature-major x to avoid it entirely

    w1t, w2t, pvec = params["w1t"], params["w2t"], params["pvec"]
    H1, H2 = w1t.shape[0], w2t.shape[0]

    # Batch tile (lane dim): multiples of 128, large enough to amortize the ~0.35us
    # per-grid-step overhead.  Dense footprint at tb=8192 is ~5 MiB -> safe on all gens.
    if B <= 128:
        tb = B                      # single block, lane dim == full array dim
    else:
        if tb is None:
            tb = 8192
        tb = max(128, min(int(tb), pl.cdiv(B, 128) * 128))
        tb = pl.cdiv(tb, 128) * 128
        # Keep >=2 grid steps so both TensorCores are used on dual-TC parts (v7x);
        # the extra ~0.35us step overhead is negligible on single-TC v5e/v6e.
        tb = min(tb, pl.cdiv(pl.cdiv(B, 2), 128) * 128)

    out = pl.pallas_call(
        coxph_kernel,
        out_shape=jax.ShapeDtypeStruct((1, B), jnp.float32),
        grid_spec=pltpu.PrefetchScalarGridSpec(
            num_scalar_prefetch=0,
            grid=(pl.cdiv(B, tb),),
            in_specs=[
                pl.BlockSpec((F, tb), lambda i: (0, i)),      # x tile (pipelined)
                pl.BlockSpec((H1, F), lambda i: (0, 0)),      # W1' resident in VMEM
                pl.BlockSpec((H2, H1), lambda i: (0, 0)),     # W2' resident in VMEM
                pl.BlockSpec((128, 8), lambda i: (0, 0)),     # packed b1'/b2'/w3/b3
            ],
            out_specs=pl.BlockSpec((1, tb), lambda i: (0, i)),  # lane-dense score row
        ),
        compiler_params=pltpu.CompilerParams(
            dimension_semantics=("parallel",)),
    )(xt, w1t, w2t, pvec)
    return out.reshape(B, 1)


def make_params(key, n_features, hidden):
    """Synthetic PyTorch-like params with BatchNorm folded into the Linear layers."""
    dims = list(hidden) + [1]
    H1, H2 = dims[0], dims[1]
    assert H1 <= 128 and H2 <= 128, "packed-param layout assumes hidden dims <= 128"
    keys = jax.random.split(key, 14)
    ki = iter(range(14))

    def linear(kw, kb, fan_in, fan_out):
        bound = 1.0 / jnp.sqrt(fan_in)
        w = jax.random.uniform(kw, (fan_in, fan_out), jnp.float32, -bound, bound)  # [in,out]
        b = jax.random.uniform(kb, (1, fan_out), jnp.float32, -bound, bound)
        return w, b

    def folded_bn(kg, kb, km, kv, h, eps=1e-5):
        gamma = 1.0 + 0.1 * jax.random.normal(kg, (1, h), jnp.float32)
        beta = 0.1 * jax.random.normal(kb, (1, h), jnp.float32)
        mean = 0.1 * jax.random.normal(km, (1, h), jnp.float32)
        var = jnp.abs(jax.random.normal(kv, (1, h), jnp.float32)) + 0.5
        scale = gamma / jnp.sqrt(var + eps)
        shift = beta - mean * scale
        return scale, shift

    w1, b1 = linear(keys[next(ki)], keys[next(ki)], n_features, H1)
    s1, t1 = folded_bn(keys[next(ki)], keys[next(ki)], keys[next(ki)], keys[next(ki)], H1)
    w2, b2 = linear(keys[next(ki)], keys[next(ki)], H1, H2)
    s2, t2 = folded_bn(keys[next(ki)], keys[next(ki)], keys[next(ki)], keys[next(ki)], H2)
    w3, b3 = linear(keys[next(ki)], keys[next(ki)], H2, dims[2])

    # Exact BN fold (scale columns of W, adjust bias) -- happens before the ReLU.
    w1f = w1 * s1
    b1f = b1 * s1 + t1
    w2f = w2 * s2
    b2f = b2 * s2 + t2

    # Pack the tiny vectors into a single (128, 8) f32 slab (column vectors for the
    # lane-dense orientation).
    pvec = jnp.zeros((128, 8), jnp.float32)
    pvec = pvec.at[:H1, 0].set(b1f[0])
    pvec = pvec.at[:H2, 1].set(b2f[0])
    pvec = pvec.at[:H2, 2].set(w3[:, 0])
    pvec = pvec.at[0, 3].set(b3[0, 0])

    return dict(w1t=w1f.T.astype(jnp.bfloat16),     # [H1, F]
                w2t=w2f.T.astype(jnp.bfloat16),     # [H2, H1]
                pvec=pvec)


def reference_forward(x, p):
    """Pure-JAX reference mirroring the kernel's bf16-input / f32-accumulate numerics."""
    w1t = p["w1t"].astype(jnp.float32)
    w2t = p["w2t"].astype(jnp.float32)
    H1, H2 = w1t.shape[0], w2t.shape[0]
    pv = p["pvec"]
    b1 = pv[:H1, 0]
    b2 = pv[:H2, 1]
    w3 = pv[:H2, 2]
    b3 = pv[0, 3]

    xb = x.astype(jnp.bfloat16).astype(jnp.float32)
    h = jnp.maximum(xb @ w1t.T + b1, 0.0)
    h = jnp.maximum(h.astype(jnp.bfloat16).astype(jnp.float32) @ w2t.T + b2, 0.0)
    return (h * w3).sum(axis=-1, keepdims=True) + b3


if __name__ == "__main__":
    # config: n_features=16, hidden_size=[32, 32], norm=True, activation='ReLU', dropout=0.1
    B, F = 8, 16
    hidden = [32, 32]

    key = jax.random.PRNGKey(0)
    kx, kp = jax.random.split(key)
    x = jax.random.normal(kx, (B, F), jnp.float32)
    params = make_params(kp, F, hidden)

    out = coxph_forward(x, params)
    jax.block_until_ready(out)

    ref = reference_forward(x, params)
    assert out.shape == (B, 1), out.shape
    assert jnp.allclose(out, ref, atol=2e-3, rtol=2e-3), "mismatch vs reference"

    print("KERNEL_OK")
</pallas_src>

<mosaic_0001>
module attributes {stable_mosaic.version = 11 : i64} {
  func.func @coxph_kernel(%arg0: i32, %arg1: memref<16x8xf32, #tpu.memory_space<vmem>>, %arg2: memref<32x16xbf16, #tpu.memory_space<vmem>>, %arg3: memref<32x32xbf16, #tpu.memory_space<vmem>>, %arg4: memref<128x8xf32, #tpu.memory_space<vmem>>, %arg5: memref<1x8xf32, #tpu.memory_space<vmem>>) attributes {dimension_semantics = [#tpu.dimension_semantics<parallel>], iteration_bounds = array<i64: 1>, scalar_prefetch = 0 : i64, scratch_operands = 0 : i64, tpu.core_type = #tpu.core_type<tc>, window_params = [{transform_indices = @transform_0, window_bounds = array<i64: 16, 8>}, {pipeline_mode = #tpu.pipeline_mode<synchronous>, transform_indices = @transform_1, window_bounds = array<i64: 32, 16>}, {pipeline_mode = #tpu.pipeline_mode<synchronous>, transform_indices = @transform_2, window_bounds = array<i64: 32, 32>}, {pipeline_mode = #tpu.pipeline_mode<synchronous>, transform_indices = @transform_3, window_bounds = array<i64: 128, 8>}, {transform_indices = @transform_4, window_bounds = array<i64: 1, 8>}]} {
    %c0 = arith.constant 0 : index
    %c0_0 = arith.constant 0 : index
    %0 = vector.load %arg4[%c0, %c0_0] : memref<128x8xf32, #tpu.memory_space<vmem>>, vector<32x1xf32>
    %c0_1 = arith.constant 0 : index
    %c1 = arith.constant 1 : index
    %1 = vector.load %arg4[%c0_1, %c1] : memref<128x8xf32, #tpu.memory_space<vmem>>, vector<32x1xf32>
    %c0_2 = arith.constant 0 : index
    %c2 = arith.constant 2 : index
    %2 = vector.load %arg4[%c0_2, %c2] : memref<128x8xf32, #tpu.memory_space<vmem>>, vector<32x1xf32>
    %c0_3 = arith.constant 0 : index
    %c3 = arith.constant 3 : index
    %3 = vector.load %arg4[%c0_3, %c3] : memref<128x8xf32, #tpu.memory_space<vmem>>, vector<1x1xf32>
    %c0_4 = arith.constant 0 : index
    %c0_5 = arith.constant 0 : index
    %4 = vector.load %arg1[%c0_4, %c0_5] : memref<16x8xf32, #tpu.memory_space<vmem>>, vector<16x8xf32>
    %5 = arith.truncf %4 : vector<16x8xf32> to vector<16x8xbf16>
    %c0_6 = arith.constant 0 : index
    %c0_7 = arith.constant 0 : index
    %6 = vector.load %arg2[%c0_6, %c0_7] : memref<32x16xbf16, #tpu.memory_space<vmem>>, vector<32x16xbf16>
    %cst = arith.constant dense<0.000000e+00> : vector<32x8xf32>
    %7 = tpu.matmul %6, %5, %cst {dimension_numbers = #tpu.dot_dimension_numbers<[1], [0], [0], [1], [0, 0, 1, 1], [], []>} : vector<32x16xbf16>, vector<16x8xbf16>, vector<32x8xf32> -> vector<32x8xf32>
    %8 = vector.broadcast %0 : vector<32x1xf32> to vector<32x8xf32>
    %9 = arith.addf %7, %8 : vector<32x8xf32>
    %cst_8 = arith.constant 0.000000e+00 : f32
    %10 = vector.broadcast %cst_8 : f32 to vector<32x8xf32>
    %11 = arith.maximumf %9, %10 : vector<32x8xf32>
    %c0_9 = arith.constant 0 : index
    %c0_10 = arith.constant 0 : index
    %12 = vector.load %arg3[%c0_9, %c0_10] : memref<32x32xbf16, #tpu.memory_space<vmem>>, vector<32x32xbf16>
    %13 = arith.truncf %11 : vector<32x8xf32> to vector<32x8xbf16>
    %cst_11 = arith.constant dense<0.000000e+00> : vector<32x8xf32>
    %14 = tpu.matmul %12, %13, %cst_11 {dimension_numbers = #tpu.dot_dimension_numbers<[1], [0], [0], [1], [0, 0, 1, 1], [], []>} : vector<32x32xbf16>, vector<32x8xbf16>, vector<32x8xf32> -> vector<32x8xf32>
    %15 = vector.broadcast %1 : vector<32x1xf32> to vector<32x8xf32>
    %16 = arith.addf %14, %15 : vector<32x8xf32>
    %cst_12 = arith.constant 0.000000e+00 : f32
    %17 = vector.broadcast %cst_12 : f32 to vector<32x8xf32>
    %18 = arith.maximumf %16, %17 : vector<32x8xf32>
    %19 = vector.broadcast %2 : vector<32x1xf32> to vector<32x8xf32>
    %20 = arith.mulf %18, %19 : vector<32x8xf32>
    %cst_13 = arith.constant dense<0.000000e+00> : vector<8xf32>
    %21 = vector.multi_reduction <add>, %20, %cst_13 [0] : vector<32x8xf32> to vector<8xf32>
    %22 = vector.shape_cast %21 : vector<8xf32> to vector<1x8xf32>
    %23 = vector.broadcast %3 : vector<1x1xf32> to vector<1x8xf32>
    %24 = arith.addf %22, %23 : vector<1x8xf32>
    %c0_14 = arith.constant 0 : index
    %c0_15 = arith.constant 0 : index
    %25 = vector.load %arg5[%c0_14, %c0_15] : memref<1x8xf32, #tpu.memory_space<vmem>>, vector<1x8xf32>
    tpu.vector_store %arg5[%c0_14, %c0_15], %24 {strides = array<i32>} : memref<1x8xf32, #tpu.memory_space<vmem>>, vector<1x8xf32>,
    return
  }
  func.func @transform_0(%arg0: i32) -> (i32, i32) {
    %c0_i32 = arith.constant 0 : i32
    %c0_i32_0 = arith.constant 0 : i32
    return %c0_i32, %arg0 : i32, i32
  }
  func.func @transform_1(%arg0: i32) -> (i32, i32) {
    %c0_i32 = arith.constant 0 : i32
    %c0_i32_0 = arith.constant 0 : i32
    %c0_i32_1 = arith.constant 0 : i32
    return %c0_i32, %c0_i32_0 : i32, i32
  }
  func.func @transform_2(%arg0: i32) -> (i32, i32) {
    %c0_i32 = arith.constant 0 : i32
    %c0_i32_0 = arith.constant 0 : i32
    %c0_i32_1 = arith.constant 0 : i32
    return %c0_i32, %c0_i32_0 : i32, i32
  }
  func.func @transform_3(%arg0: i32) -> (i32, i32) {
    %c0_i32 = arith.constant 0 : i32
    %c0_i32_0 = arith.constant 0 : i32
    %c0_i32_1 = arith.constant 0 : i32
    return %c0_i32, %c0_i32_0 : i32, i32
  }
  func.func @transform_4(%arg0: i32) -> (i32, i32) {
    %c0_i32 = arith.constant 0 : i32
    %c0_i32_0 = arith.constant 0 : i32
    return %c0_i32, %arg0 : i32, i32
  }
}

</mosaic_0001>

<llo_original>
// kernel: tpu_custom_call.1
$region0: #{tpu_custom_call.1}
  #allocation0 [shape = 'u32[]', space=smem, size = 0x4, offset = 0x4, fixed_abs, tag = 'smem constant byte address 0x4 - core index']
  #allocation1 [shape = 'u32[72,128]{1,0:T(1,128)}', space=vmem, size = 0x9000, scoped, tag = 'internal scratch']
  %s0 = inlined_call_operand.vmem [shape: f32[16,8], index: 0, kind: input, shape index: {}]
  %s1 = inlined_call_operand.vmem [shape: bf16[32,16], index: 1, kind: input, shape index: {}]
  %s2 = inlined_call_operand.vmem [shape: bf16[32,32], index: 2, kind: input, shape index: {}]
  %s3 = inlined_call_operand.vmem [shape: f32[128,8], index: 3, kind: input, shape index: {}]
  %s4 = inlined_call_operand.hbm [shape: f32[1,8], index: 4, kind: output, shape index: {}]
  %s5 = sld [smem:[#allocation0]]
  $region26: #{tpu_custom_call.1} parent=0
    _
  %s7 = ssub.s32 1, %s5
  %s8 = scalar_select 0, %s7, %s5
  $region1: #{tpu_custom_call.1} parent=0
    #allocation2 [shape = 'u8[512]{0}', space=vmem, size = 0x400, scoped, tag = 'output window, operand 0, single buffered']
    #allocation3 [shape = 's32[1]{0}', space=sflag, size = 0x4, scoped, tag = 'scoped memory for tpu_custom_call.1']
    %9 = vsyncpa [#allocation3], 0
    // Predicated region
    $region2: #{tpu_custom_call.1} parent=1 // pred_check
      _
    $region3: #{tpu_custom_call.1} parent=1 // pred_check_branch
      %11 = sbr.rel (0) target = $region5
    $region4: #{tpu_custom_call.1} parent=1 // pred_region
      _
    $region5: #{tpu_custom_call.1} parent=1 // pred_fallthru
      _
    // Predicated region
    $region6: #{tpu_custom_call.1} parent=1 // pred_check
      _
    $region7: #{tpu_custom_call.1} parent=1 // pred_check_branch
      %13 = sbr.rel (0) target = $region9
    $region8: #{tpu_custom_call.1} parent=1 // pred_region
      _
    $region9: #{tpu_custom_call.1} parent=1 // pred_fallthru
      _
    // Predicated region
    $region10: #{tpu_custom_call.1} parent=1 // pred_check
      _
    $region11: #{tpu_custom_call.1} parent=1 // pred_check_branch
      %15 = sbr.rel (0) target = $region13
    $region12: #{tpu_custom_call.1} parent=1 // pred_region
      _
    $region13: #{tpu_custom_call.1} parent=1 // pred_fallthru
      _
    // Predicated region
    $region14: #{tpu_custom_call.1} parent=1 // pred_check
      _
    $region15: #{tpu_custom_call.1} parent=1 // pred_check_branch
      %17 = sbr.rel (0) target = $region17
    $region16: #{tpu_custom_call.1} parent=1 // pred_region
      _
    $region17: #{tpu_custom_call.1} parent=1 // pred_fallthru
      _
    %v19 = vld [vmem:[%s3] sm:$0xff]
    %v20 = vld [vmem:[%s3 + $0x8] sm:$0xff]
    %v21 = vld [vmem:[%s3 + $0x10] sm:$0xff]
    %v22 = vld [vmem:[%s3 + $0x18] sm:$0xff]
    %v23 = vld [vmem:[%s3] sm:$0x1]
    %v24 = vld [vmem:[%s0] sm:$0xff]
    %v25 = vld [vmem:[%s0 + $0x8] sm:$0xff]
    %v26 = vpack.c.bf16 %v25, %v24
    %v27 = vld [vmem:[%s1] sm:$0xf]
    %v28 = vld [vmem:[%s1 + $0x4] sm:$0xf]
    %v29 = vld [vmem:[%s1 + $0x8] sm:$0xf]
    %v30 = vld [vmem:[%s1 + $0xc] sm:$0xf]
    %32 = vset.pattern.permute.xlu0 0
    %33 = vperm.xlu0 %32, %v19
    %v34 = vpop.permute.xlu0 %33
    %37 = vset.pattern.permute.xlu0 0
    %38 = vperm.xlu0 %37, %v20
    %v39 = vpop.permute.xlu0 %38
    %42 = vset.pattern.permute.xlu0 0
    %43 = vperm.xlu0 %42, %v21
    %v44 = vpop.permute.xlu0 %43
    %47 = vset.pattern.permute.xlu0 0
    %48 = vperm.xlu0 %47, %v22
    %v49 = vpop.permute.xlu0 %48
    %v55 = vunpack.c.l.b16 %v27
    %v56 = vunpack.c.l.b16 %v28
    %v57 = vunpack.c.l.b16 %v29
    %v58 = vunpack.c.l.b16 %v30
    %v59 = vpack.c.b16 %v56, %v55
    %v60 = vpack.c.b16 %v58, %v57
    %vm61 = vcmask 130048
    %v63 = vsel %vm61, %v59, 0
    %v66 = vsel %vm61, %v60, 0
    %68 = vmatpush.bf16.msra.mxu0 0
    %69 = vmatpush.bf16.msra.mxu0 0
    %70 = vmatpush.bf16.msra.mxu0 0
    %71 = vmatpush.bf16.msra.mxu0 0
    %72 = vmatpush.bf16.msra.mxu0 0
    %73 = vmatpush.bf16.msra.mxu0 0
    %74 = vmatpush.bf16.msra.mxu0 0
    %75 = vmatpush.bf16.msra.mxu0 %v26
    %76 = vmatmul.bf16.gmra.mxu0 %v63
    %v77 = vpop.f32.mrf.mxu0
    %v78 = vadd.f32 %v34, %v77
    %v79 = vpop.f32.mrf.mxu0
    %v80 = vadd.f32 %v39, %v79
    %81 = vmatmul.bf16.gmra.mxu0 %v66
    %v82 = vpop.f32.mrf.mxu0
    %v83 = vadd.f32 %v44, %v82
    %v84 = vpop.f32.mrf.mxu0
    %v85 = vadd.f32 %v49, %v84
    %86 = vdwg.mxu0
    %v87 = vmax.f32 %v78, 0.0
    %v88 = vmax.f32 %v80, 0.0
    %v89 = vmax.f32 %v83, 0.0
    %v90 = vmax.f32 %v85, 0.0
    %v91 = vld [vmem:[%s2] sm:$0xf]
    %v92 = vld [vmem:[%s2 + $0x4] sm:$0xf]
    %v93 = vld [vmem:[%s2 + $0x8] sm:$0xf]
    %v94 = vld [vmem:[%s2 + $0xc] sm:$0xf]
    %v95 = vpack.c.bf16 %v88, %v87
    %v96 = vpack.c.bf16 %v90, %v89
    %97 = vset.pattern.permute.xlu0 1
    %98 = vperm.xlu0 %97, %v19
    %v99 = vpop.permute.xlu0 %98
    %101 = vset.pattern.permute.xlu0 1
    %102 = vperm.xlu0 %101, %v20
    %v103 = vpop.permute.xlu0 %102
    %105 = vset.pattern.permute.xlu0 1
    %106 = vperm.xlu0 %105, %v21
    %v107 = vpop.permute.xlu0 %106
    %109 = vset.pattern.permute.xlu0 1
    %110 = vperm.xlu0 %109, %v22
    %v111 = vpop.permute.xlu0 %110
    %v117 = vunpack.c.l.b16 %v91
    %v118 = vunpack.c.l.b16 %v92
    %v119 = vunpack.c.l.b16 %v93
    %v120 = vunpack.c.l.b16 %v94
    %v121 = vpack.c.b16 %v118, %v117
    %v122 = vpack.c.b16 %v120, %v119
    %vm123 = vcmask 261120
    %v125 = vsel %vm123, %v121, 0
    %v128 = vsel %vm123, %v122, 0
    %130 = vmatpush.bf16.msra.mxu0 0
    %131 = vmatpush.bf16.msra.mxu0 0
    %132 = vmatpush.bf16.msra.mxu0 0
    %133 = vmatpush.bf16.msra.mxu0 0
    %134 = vmatpush.bf16.msra.mxu0 0
    %135 = vmatpush.bf16.msra.mxu0 0
    %136 = vmatpush.bf16.msra.mxu0 %v96
    %137 = vmatpush.bf16.msra.mxu0 %v95
    %138 = vmatmul.bf16.gmra.mxu0 %v125
    %v139 = vpop.f32.mrf.mxu0
    %v140 = vadd.f32 %v99, %v139
    %v141 = vpop.f32.mrf.mxu0
    %v142 = vadd.f32 %v103, %v141
    %143 = vmatmul.bf16.gmra.mxu0 %v128
    %v144 = vpop.f32.mrf.mxu0
    %v145 = vadd.f32 %v107, %v144
    %v146 = vpop.f32.mrf.mxu0
    %v147 = vadd.f32 %v111, %v146
    %148 = vdwg.mxu0
    %v149 = vmax.f32 %v140, 0.0
    %v150 = vmax.f32 %v142, 0.0
    %v151 = vmax.f32 %v145, 0.0
    %v152 = vmax.f32 %v147, 0.0
    %153 = vset.pattern.permute.xlu0 2
    %154 = vperm.xlu0 %153, %v19
    %v155 = vpop.permute.xlu0 %154
    %157 = vset.pattern.permute.xlu0 2
    %158 = vperm.xlu0 %157, %v20
    %v159 = vpop.permute.xlu0 %158
    %161 = vset.pattern.permute.xlu0 2
    %162 = vperm.xlu0 %161, %v21
    %v163 = vpop.permute.xlu0 %162
    %165 = vset.pattern.permute.xlu0 2
    %166 = vperm.xlu0 %165, %v22
    %v167 = vpop.permute.xlu0 %166
    %v169 = vmul.f32 %v149, %v155
    %v170 = vmul.f32 %v150, %v159
    %v171 = vmul.f32 %v151, %v163
    %v172 = vmul.f32 %v152, %v167
    %vm173 = vcmask 64512
    %v174 = vsel %vm173, %v169, 0.0
    %v175 = vsel %vm173, %v170, 0.0
    %v176 = vadd.f32 %v174, %v175
    %v177 = vsel %vm173, %v171, 0.0
    %v178 = vadd.f32 %v176, %v177
    %v179 = vsel %vm173, %v172, 0.0
    %v180 = vadd.f32 %v178, %v179
    %v181 = vrot.slane %v180, 4
    %v182 = vadd.f32 %v180, %v181
    %v183 = vrot.slane %v182, 2
    %v184 = vadd.f32 %v182, %v183
    %v185 = vrot.slane %v184, 1
    %v186 = vadd.f32 %v184, %v185
    %188 = vset.pattern.permute.xlu0 3
    %189 = vperm.xlu0 %188, %v23
    %v190 = vpop.permute.xlu0 %189
    %v192 = vadd.f32 %v186, %v190
    %vm193 = vcmask 57344
    %194 = vst.msk [vmem:[#allocation2] sm:$0x1] %vm193, %v192
    // Predicated region
    $region18: #{tpu_custom_call.1} parent=1 // pred_check
      _
    $region19: #{tpu_custom_call.1} parent=1 // pred_check_branch
      %196 = sbr.rel (0) target = $region21
    $region20: #{tpu_custom_call.1} parent=1 // pred_region
      %198 = vsyncadd [#allocation3], 0
      %s200 = sshll.u32 [#allocation2], 4
      %s201 = int_to_ptr.vmem [resolvable:$true] %s200
      %s202 = sshll.u32 %s4, 4
      %s203 = int_to_ptr.hbm [resolvable:$true] %s202
      %205 = dma.vmem_to_hbm [thread:$0]  %s201, 16, %s203, [#allocation3]
    $region21: #{tpu_custom_call.1} parent=1 // pred_fallthru
      _
    // Predicated region
    $region22: #{tpu_custom_call.1} parent=1 // pred_check
      _
    $region23: #{tpu_custom_call.1} parent=1 // pred_check_branch
      %207 = sbr.rel (0) target = $region25
    $region24: #{tpu_custom_call.1} parent=1 // pred_region
      %209 = dma.done [#allocation3], 16
    $region25: #{tpu_custom_call.1} parent=1 // pred_fallthru
      _
    %210 = vsyncpa [#allocation3], 1

</llo_original>
